<compile_context>
chip_gen: v7x
topology: tpu7x:2x2x1
jax: 0.10.0
libtpu: 0.0.40
codegen_flags: <defaults>
</compile_context>

<pallas_src>
import jax
import jax.numpy as jnp
from jax import lax
from jax.experimental import pallas as pl
from jax.experimental.pallas import tpu as pltpu

EPS = 1e-5


# ---------------------------------------------------------------------------
# Weight preparation (runs once, outside the kernel).
# ---------------------------------------------------------------------------
def _band_matrix(taps, W):
    """taps: (3, Ci, Co) — the kx taps of one ky row (BN scale pre-folded).

    Returns the (W*Ci, W*Co) block-banded matrix M with
      M[(w+kx-1)*Ci + ci, w*Co + co] = taps[kx, ci, co]
    (out-of-range width taps drop out == zero padding), so for row-flattened
    activations a of shape (rows, W*Ci), (a @ M)[r] is the full kx/ci
    contraction of the conv output row r for this ky tap.
    """
    _, Ci, Co = taps.shape
    m = jnp.zeros((W * Ci, W * Co), taps.dtype)
    for kx in range(3):
        m = m + jnp.kron(jnp.eye(W, W, 1 - kx, dtype=taps.dtype), taps[kx])
    return m


def _pick_b_tile(N, H):
    """Batch rows folded per grid step: push M = b_tile*H toward 256 (the
    v6e/v7x MXU height) while keeping >= 2 grid steps (both v7x TCs busy)."""
    max_bt = max(1, N // 2)
    b_tile = 1
    for bt in range(1, max_bt + 1):
        if N % bt == 0:
            b_tile = bt
            if bt * H >= 256:
                break
    return b_tile


def nchw_to_rows(x_nchw):
    """(N, C, H, W) -> (N, H, W*C) channels-last, row-flattened layout."""
    N, C, H, W = x_nchw.shape
    return jnp.transpose(x_nchw, (0, 2, 3, 1)).reshape(N, H, W * C)


def rows_to_nchw(rows, W):
    N, H, WC = rows.shape
    return jnp.transpose(rows.reshape(N, H, W, WC // W), (0, 3, 1, 2))


# ---------------------------------------------------------------------------
# Fused DWTConvBlock forward.
# ---------------------------------------------------------------------------
def dwt_conv_block_rows(x_rows, p, *, W, b_tile=None):
    """Hot-path entry point: x_rows is (N, H, W*Cin) rows-layout activations;
    returns (N, H, W*Cout).  Chain consecutive blocks in this layout to keep
    NCHW<->rows transposes out of the hot path."""
    N, H, WC_IN = x_rows.shape
    Cout = p["w1"].shape[-1]
    WC_OUT = W * Cout
    # Lane density: keep W*Cout a multiple of 128 (pad Cout/W upstream if
    # needed) so per-tap column slices and the store stay vreg-aligned.

    if b_tile is None:
        b_tile = _pick_b_tile(N, H)
    m_rows = b_tile * H

    # Fold BatchNorm (inference) scales into the conv weights (convs have no
    # bias, so scale folding is exact); only the additive shifts remain.
    inv1 = p["g1"] / jnp.sqrt(p["v1"] + EPS)
    inv2 = p["g2"] / jnp.sqrt(p["v2"] + EPS)
    w1s = p["w1"] * inv1[None, None, None, :]            # (3, 3, Cin, Cout)
    w2s = p["w2"] * inv2[None, None, None, :]            # (3, 3, Cout, Cout)

    # Stage-A weights: conv1's three ky taps + the 1x1 residual projection,
    # concatenated along the matmul N dim -> (W*Cin, 4*W*Cout).  bf16 MXU
    # operands, f32 accumulation.
    wa = jnp.concatenate(
        [_band_matrix(w1s[ky], W) for ky in range(3)]
        + [jnp.kron(jnp.eye(W, dtype=jnp.float32), p["w3"])],
        axis=1).astype(jnp.bfloat16)
    # Stage-B weights: conv2's three ky taps -> (W*Cout, 3*W*Cout).
    wb = jnp.concatenate(
        [_band_matrix(w2s[ky], W) for ky in range(3)], axis=1
    ).astype(jnp.bfloat16)

    # Additive shifts, tiled across W so they broadcast along the lane axis.
    b1 = jnp.tile(p["be1"] - p["m1"] * inv1, W).reshape(1, WC_OUT)
    b2 = jnp.tile(p["be2"] - p["m2"] * inv2 + p["b3"], W).reshape(1, WC_OUT)

    def kernel(x_ref, wa_ref, b1_ref, wb_ref, b2_ref, o_ref):
        # Hoisted ky boundary masks; `row % H` keeps batch-folded rows from
        # leaking across images.
        ri = lax.broadcasted_iota(jnp.int32, (m_rows, 1), 0)
        top = (ri % H) == 0          # image row 0:   nothing above
        bot = (ri % H) == H - 1      # image row H-1: nothing below

        def from_above(t):   # ky=0 tap: out[h] += f(in[h-1])
            return jnp.where(top, 0.0, pltpu.roll(t, shift=1, axis=0))

        def from_below(t):   # ky=2 tap: out[h] += f(in[h+1])
            return jnp.where(bot, 0.0, pltpu.roll(t, shift=m_rows - 1, axis=0))

        # Stage A: one MXU matmul -> conv1's 3 ky taps + the residual branch.
        x = x_ref[...].astype(jnp.bfloat16)               # (M, W*Cin)
        ra = jnp.dot(x, wa_ref[...], preferred_element_type=jnp.float32)
        c1 = (from_above(ra[:, :WC_OUT])
              + ra[:, WC_OUT:2 * WC_OUT]
              + from_below(ra[:, 2 * WC_OUT:3 * WC_OUT]))
        out1 = jnp.maximum(c1 + b1_ref[...], 0.0)         # bn1 shift + relu

        # Stage B: one MXU matmul -> conv2's 3 ky taps.
        rb = jnp.dot(out1.astype(jnp.bfloat16), wb_ref[...],
                     preferred_element_type=jnp.float32)
        c2 = (from_above(rb[:, :WC_OUT])
              + rb[:, WC_OUT:2 * WC_OUT]
              + from_below(rb[:, 2 * WC_OUT:3 * WC_OUT]))

        # bn2 shift + residual bias (combined in b2); conv4 == Identity.
        out = c2 + ra[:, 3 * WC_OUT:] + b2_ref[...]
        o_ref[...] = out.astype(o_ref.dtype)              # lane-dense store

    # Scoped-VMEM budget: activation blocks + (double-buffered) constants,
    # with headroom.  v5e's default scoped limit (~16 MiB) is raised here.
    est = (2 * m_rows * (WC_IN + WC_OUT) * 4
           + 2 * (wa.size + wb.size) * 2
           + 2 * (b1.size + b2.size) * 4)
    vmem_limit = int(max(32 * 2**20, min(4 * est, 100 * 2**20)))

    x2d = x_rows.reshape(N * H, WC_IN)                    # free leading-dim collapse
    const = lambda shape: pl.BlockSpec(shape, lambda n: (0, 0))

    out2d = pl.pallas_call(
        kernel,
        out_shape=jax.ShapeDtypeStruct((N * H, WC_OUT), x_rows.dtype),
        grid_spec=pltpu.PrefetchScalarGridSpec(
            num_scalar_prefetch=0,
            grid=(N // b_tile,),
            in_specs=[
                pl.BlockSpec((m_rows, WC_IN), lambda n: (n, 0)),
                const(wa.shape), const(b1.shape),
                const(wb.shape), const(b2.shape),
            ],
            out_specs=pl.BlockSpec((m_rows, WC_OUT), lambda n: (n, 0)),
        ),
        compiler_params=pltpu.CompilerParams(
            dimension_semantics=("parallel",),
            vmem_limit_bytes=vmem_limit),
    )(x2d, wa, b1, wb, b2)

    return out2d.reshape(N, H, WC_OUT)


def dwt_conv_block_nchw(x_nchw, p, *, b_tile=None):
    """Drop-in NCHW forward matching the PyTorch module's interface.  (For
    chained blocks prefer dwt_conv_block_rows to avoid the HBM transposes.)"""
    W = x_nchw.shape[-1]
    out_rows = dwt_conv_block_rows(nchw_to_rows(x_nchw), p, W=W, b_tile=b_tile)
    return rows_to_nchw(out_rows, W)


# ---------------------------------------------------------------------------
# Pure-JAX reference (NCHW), mirrors the PyTorch forward (eval-mode BN).
# ---------------------------------------------------------------------------
def dwt_conv_block_ref(x, p):
    dn = ("NCHW", "HWIO", "NCHW")
    out = lax.conv_general_dilated(x, p["w1"], (1, 1), ((1, 1), (1, 1)),
                                   dimension_numbers=dn)
    inv1 = p["g1"] / jnp.sqrt(p["v1"] + EPS)
    out = out * inv1[None, :, None, None] \
        + (p["be1"] - p["m1"] * inv1)[None, :, None, None]
    out = jnp.maximum(out, 0.0)
    out = lax.conv_general_dilated(out, p["w2"], (1, 1), ((1, 1), (1, 1)),
                                   dimension_numbers=dn)
    inv2 = p["g2"] / jnp.sqrt(p["v2"] + EPS)
    out = out * inv2[None, :, None, None] \
        + (p["be2"] - p["m2"] * inv2)[None, :, None, None]
    ident = lax.conv_general_dilated(x, p["w3"][None, None, :, :], (1, 1),
                                     ((0, 0), (0, 0)), dimension_numbers=dn)
    ident = ident + p["b3"][None, :, None, None]
    return out + ident   # conv4 = Identity (downsample=1)


def make_params(key, cin, cout):
    ks = jax.random.split(key, 8)
    return {
        "w1": 0.1 * jax.random.normal(ks[0], (3, 3, cin, cout), jnp.float32),
        "w2": 0.1 * jax.random.normal(ks[1], (3, 3, cout, cout), jnp.float32),
        "w3": 0.1 * jax.random.normal(ks[2], (cin, cout), jnp.float32),
        "b3": 0.1 * jax.random.normal(ks[3], (cout,), jnp.float32),
        # BatchNorm params / running stats (inference mode).
        "g1": 1.0 + 0.1 * jax.random.normal(ks[4], (cout,), jnp.float32),
        "be1": 0.1 * jax.random.normal(ks[5], (cout,), jnp.float32),
        "m1": 0.05 * jax.random.normal(ks[6], (cout,), jnp.float32),
        "v1": 1.0 + 0.1 * jax.random.uniform(ks[7], (cout,), jnp.float32),
        "g2": 1.0 + 0.05 * jnp.arange(cout, dtype=jnp.float32) / cout,
        "be2": 0.02 * jnp.arange(cout, dtype=jnp.float32),
        "m2": 0.01 * jnp.arange(cout, dtype=jnp.float32),
        "v2": 0.9 + 0.05 * jnp.arange(cout, dtype=jnp.float32) / cout,
    }


if __name__ == "__main__":
    N, Cin, Cout, H, W = 2, 4, 8, 16, 16   # stride=1, downsample=1; W*Cout=128
    key = jax.random.PRNGKey(0)
    kx, kp = jax.random.split(key)
    x = jax.random.normal(kx, (N, Cin, H, W), jnp.float32)
    params = make_params(kp, Cin, Cout)

    out = jax.block_until_ready(dwt_conv_block_nchw(x, params))
    ref = jax.block_until_ready(dwt_conv_block_ref(x, params))

    assert out.shape == (N, Cout, H, W), out.shape
    err = float(jnp.max(jnp.abs(out - ref)))
    # bf16 MXU operands with f32 accumulation -> loosened tolerance.
    assert jnp.allclose(out, ref, rtol=5e-2, atol=5e-2), err
    print("KERNEL_OK")
</pallas_src>

<mosaic_0001>
module attributes {stable_mosaic.version = 11 : i64} {
  func.func @kernel(%arg0: i32, %arg1: memref<16x64xf32, #tpu.memory_space<vmem>>, %arg2: memref<64x512xbf16, #tpu.memory_space<vmem>>, %arg3: memref<1x128xf32, #tpu.memory_space<vmem>>, %arg4: memref<128x384xbf16, #tpu.memory_space<vmem>>, %arg5: memref<1x128xf32, #tpu.memory_space<vmem>>, %arg6: memref<16x128xf32, #tpu.memory_space<vmem>>) attributes {dimension_semantics = [#tpu.dimension_semantics<parallel>], iteration_bounds = array<i64: 2>, scalar_prefetch = 0 : i64, scratch_operands = 0 : i64, tpu.core_type = #tpu.core_type<tc>, window_params = [{transform_indices = @transform_0, window_bounds = array<i64: 16, 64>}, {pipeline_mode = #tpu.pipeline_mode<synchronous>, transform_indices = @transform_1, window_bounds = array<i64: 64, 512>}, {pipeline_mode = #tpu.pipeline_mode<synchronous>, transform_indices = @transform_2, window_bounds = array<i64: 1, 128>}, {pipeline_mode = #tpu.pipeline_mode<synchronous>, transform_indices = @transform_3, window_bounds = array<i64: 128, 384>}, {pipeline_mode = #tpu.pipeline_mode<synchronous>, transform_indices = @transform_4, window_bounds = array<i64: 1, 128>}, {transform_indices = @transform_5, window_bounds = array<i64: 16, 128>}]} {
    %0 = tpu.iota {dimensions = array<i32: 0>} : vector<16x1xi32>
    %c16_i32 = arith.constant 16 : i32
    %c0_i32 = arith.constant 0 : i32
    %1 = arith.cmpi eq, %c16_i32, %c0_i32 : i32
    %c1_i32 = arith.constant 1 : i32
    %2 = arith.select %1, %c1_i32, %c16_i32 : i32
    %3 = vector.broadcast %2 : i32 to vector<16x1xi32>
    %4 = arith.remsi %0, %3 : vector<16x1xi32>
    %c0_i32_0 = arith.constant 0 : i32
    %5 = vector.broadcast %c0_i32_0 : i32 to vector<16x1xi32>
    %6 = arith.cmpi ne, %4, %5 : vector<16x1xi32>
    %c0_i32_1 = arith.constant 0 : i32
    %7 = vector.broadcast %c0_i32_1 : i32 to vector<16x1xi32>
    %8 = arith.cmpi slt, %4, %7 : vector<16x1xi32>
    %c0_i32_2 = arith.constant 0 : i32
    %9 = arith.cmpi slt, %2, %c0_i32_2 : i32
    %10 = vector.broadcast %9 : i1 to vector<16x1xi1>
    %11 = vector.broadcast %10 : vector<16x1xi1> to vector<16x1xi1>
    %12 = arith.xori %8, %11 : vector<16x1xi1>
    %13 = arith.andi %12, %6 : vector<16x1xi1>
    %14 = vector.broadcast %2 : i32 to vector<16x1xi32>
    %15 = arith.addi %4, %14 : vector<16x1xi32>
    %16 = arith.select %13, %15, %4 : vector<16x1xi1>, vector<16x1xi32>
    %c0_i32_3 = arith.constant 0 : i32
    %17 = vector.broadcast %c0_i32_3 : i32 to vector<16x1xi32>
    %18 = arith.cmpi eq, %16, %17 : vector<16x1xi32>
    %c16_i32_4 = arith.constant 16 : i32
    %c0_i32_5 = arith.constant 0 : i32
    %19 = arith.cmpi eq, %c16_i32_4, %c0_i32_5 : i32
    %c1_i32_6 = arith.constant 1 : i32
    %20 = arith.select %19, %c1_i32_6, %c16_i32_4 : i32
    %21 = vector.broadcast %20 : i32 to vector<16x1xi32>
    %22 = arith.remsi %0, %21 : vector<16x1xi32>
    %c0_i32_7 = arith.constant 0 : i32
    %23 = vector.broadcast %c0_i32_7 : i32 to vector<16x1xi32>
    %24 = arith.cmpi ne, %22, %23 : vector<16x1xi32>
    %c0_i32_8 = arith.constant 0 : i32
    %25 = vector.broadcast %c0_i32_8 : i32 to vector<16x1xi32>
    %26 = arith.cmpi slt, %22, %25 : vector<16x1xi32>
    %c0_i32_9 = arith.constant 0 : i32
    %27 = arith.cmpi slt, %20, %c0_i32_9 : i32
    %28 = vector.broadcast %27 : i1 to vector<16x1xi1>
    %29 = vector.broadcast %28 : vector<16x1xi1> to vector<16x1xi1>
    %30 = arith.xori %26, %29 : vector<16x1xi1>
    %31 = arith.andi %30, %24 : vector<16x1xi1>
    %32 = vector.broadcast %20 : i32 to vector<16x1xi32>
    %33 = arith.addi %22, %32 : vector<16x1xi32>
    %34 = arith.select %31, %33, %22 : vector<16x1xi1>, vector<16x1xi32>
    %c15_i32 = arith.constant 15 : i32
    %35 = vector.broadcast %c15_i32 : i32 to vector<16x1xi32>
    %36 = arith.cmpi eq, %34, %35 : vector<16x1xi32>
    %c0 = arith.constant 0 : index
    %c0_10 = arith.constant 0 : index
    %37 = vector.load %arg1[%c0, %c0_10] : memref<16x64xf32, #tpu.memory_space<vmem>>, vector<16x64xf32>
    %38 = arith.truncf %37 : vector<16x64xf32> to vector<16x64xbf16>
    %c0_11 = arith.constant 0 : index
    %c0_12 = arith.constant 0 : index
    %39 = vector.load %arg2[%c0_11, %c0_12] : memref<64x512xbf16, #tpu.memory_space<vmem>>, vector<64x512xbf16>
    %cst = arith.constant dense<0.000000e+00> : vector<16x512xf32>
    %40 = tpu.matmul %38, %39, %cst {dimension_numbers = #tpu.dot_dimension_numbers<[1], [0], [0], [1], [0, 0, 1, 1], [], []>} : vector<16x64xbf16>, vector<64x512xbf16>, vector<16x512xf32> -> vector<16x512xf32>
    %41 = vector.extract_strided_slice %40 {offsets = [0, 0], sizes = [16, 128], strides = [1, 1]} : vector<16x512xf32> to vector<16x128xf32>
    %c1_i32_13 = arith.constant 1 : i32
    %42 = tpu.dynamic_rotate %41 by %c1_i32_13 dim 0 : vector<16x128xf32>, i32 -> vector<16x128xf32>
    %cst_14 = arith.constant 0.000000e+00 : f32
    %43 = vector.shape_cast %18 : vector<16x1xi1> to vector<16x1xi1>
    %44 = vector.broadcast %43 : vector<16x1xi1> to vector<16x128xi1>
    %45 = vector.broadcast %cst_14 : f32 to vector<16x128xf32>
    %46 = arith.select %44, %45, %42 : vector<16x128xi1>, vector<16x128xf32>
    %47 = vector.extract_strided_slice %40 {offsets = [0, 128], sizes = [16, 128], strides = [1, 1]} : vector<16x512xf32> to vector<16x128xf32>
    %48 = arith.addf %46, %47 : vector<16x128xf32>
    %49 = vector.extract_strided_slice %40 {offsets = [0, 256], sizes = [16, 128], strides = [1, 1]} : vector<16x512xf32> to vector<16x128xf32>
    %c15_i32_15 = arith.constant 15 : i32
    %50 = tpu.dynamic_rotate %49 by %c15_i32_15 dim 0 : vector<16x128xf32>, i32 -> vector<16x128xf32>
    %cst_16 = arith.constant 0.000000e+00 : f32
    %51 = vector.shape_cast %36 : vector<16x1xi1> to vector<16x1xi1>
    %52 = vector.broadcast %51 : vector<16x1xi1> to vector<16x128xi1>
    %53 = vector.broadcast %cst_16 : f32 to vector<16x128xf32>
    %54 = arith.select %52, %53, %50 : vector<16x128xi1>, vector<16x128xf32>
    %55 = arith.addf %48, %54 : vector<16x128xf32>
    %c0_17 = arith.constant 0 : index
    %c0_18 = arith.constant 0 : index
    %56 = vector.load %arg3[%c0_17, %c0_18] : memref<1x128xf32, #tpu.memory_space<vmem>>, vector<1x128xf32>
    %57 = vector.broadcast %56 : vector<1x128xf32> to vector<16x128xf32>
    %58 = arith.addf %55, %57 : vector<16x128xf32>
    %cst_19 = arith.constant 0.000000e+00 : f32
    %59 = vector.broadcast %cst_19 : f32 to vector<16x128xf32>
    %60 = arith.maximumf %58, %59 : vector<16x128xf32>
    %61 = arith.truncf %60 : vector<16x128xf32> to vector<16x128xbf16>
    %c0_20 = arith.constant 0 : index
    %c0_21 = arith.constant 0 : index
    %62 = vector.load %arg4[%c0_20, %c0_21] : memref<128x384xbf16, #tpu.memory_space<vmem>>, vector<128x384xbf16>
    %cst_22 = arith.constant dense<0.000000e+00> : vector<16x384xf32>
    %63 = tpu.matmul %61, %62, %cst_22 {dimension_numbers = #tpu.dot_dimension_numbers<[1], [0], [0], [1], [0, 0, 1, 1], [], []>} : vector<16x128xbf16>, vector<128x384xbf16>, vector<16x384xf32> -> vector<16x384xf32>
    %64 = vector.extract_strided_slice %63 {offsets = [0, 0], sizes = [16, 128], strides = [1, 1]} : vector<16x384xf32> to vector<16x128xf32>
    %c1_i32_23 = arith.constant 1 : i32
    %65 = tpu.dynamic_rotate %64 by %c1_i32_23 dim 0 : vector<16x128xf32>, i32 -> vector<16x128xf32>
    %cst_24 = arith.constant 0.000000e+00 : f32
    %66 = vector.shape_cast %18 : vector<16x1xi1> to vector<16x1xi1>
    %67 = vector.broadcast %66 : vector<16x1xi1> to vector<16x128xi1>
    %68 = vector.broadcast %cst_24 : f32 to vector<16x128xf32>
    %69 = arith.select %67, %68, %65 : vector<16x128xi1>, vector<16x128xf32>
    %70 = vector.extract_strided_slice %63 {offsets = [0, 128], sizes = [16, 128], strides = [1, 1]} : vector<16x384xf32> to vector<16x128xf32>
    %71 = arith.addf %69, %70 : vector<16x128xf32>
    %72 = vector.extract_strided_slice %63 {offsets = [0, 256], sizes = [16, 128], strides = [1, 1]} : vector<16x384xf32> to vector<16x128xf32>
    %c15_i32_25 = arith.constant 15 : i32
    %73 = tpu.dynamic_rotate %72 by %c15_i32_25 dim 0 : vector<16x128xf32>, i32 -> vector<16x128xf32>
    %cst_26 = arith.constant 0.000000e+00 : f32
    %74 = vector.shape_cast %36 : vector<16x1xi1> to vector<16x1xi1>
    %75 = vector.broadcast %74 : vector<16x1xi1> to vector<16x128xi1>
    %76 = vector.broadcast %cst_26 : f32 to vector<16x128xf32>
    %77 = arith.select %75, %76, %73 : vector<16x128xi1>, vector<16x128xf32>
    %78 = arith.addf %71, %77 : vector<16x128xf32>
    %79 = vector.extract_strided_slice %40 {offsets = [0, 384], sizes = [16, 128], strides = [1, 1]} : vector<16x512xf32> to vector<16x128xf32>
    %80 = arith.addf %78, %79 : vector<16x128xf32>
    %c0_27 = arith.constant 0 : index
    %c0_28 = arith.constant 0 : index
    %81 = vector.load %arg5[%c0_27, %c0_28] : memref<1x128xf32, #tpu.memory_space<vmem>>, vector<1x128xf32>
    %82 = vector.broadcast %81 : vector<1x128xf32> to vector<16x128xf32>
    %83 = arith.addf %80, %82 : vector<16x128xf32>
    %c0_29 = arith.constant 0 : index
    %c0_30 = arith.constant 0 : index
    %84 = vector.load %arg6[%c0_29, %c0_30] : memref<16x128xf32, #tpu.memory_space<vmem>>, vector<16x128xf32>
    tpu.vector_store %arg6[%c0_29, %c0_30], %83 {strides = array<i32>} : memref<16x128xf32, #tpu.memory_space<vmem>>, vector<16x128xf32>,
    return
  }
  func.func @transform_0(%arg0: i32) -> (i32, i32) {
    %c0_i32 = arith.constant 0 : i32
    %c0_i32_0 = arith.constant 0 : i32
    return %arg0, %c0_i32 : i32, i32
  }
  func.func @transform_1(%arg0: i32) -> (i32, i32) {
    %c0_i32 = arith.constant 0 : i32
    %c0_i32_0 = arith.constant 0 : i32
    %c0_i32_1 = arith.constant 0 : i32
    return %c0_i32, %c0_i32_0 : i32, i32
  }
  func.func @transform_2(%arg0: i32) -> (i32, i32) {
    %c0_i32 = arith.constant 0 : i32
    %c0_i32_0 = arith.constant 0 : i32
    %c0_i32_1 = arith.constant 0 : i32
    return %c0_i32, %c0_i32_0 : i32, i32
  }
  func.func @transform_3(%arg0: i32) -> (i32, i32) {
    %c0_i32 = arith.constant 0 : i32
    %c0_i32_0 = arith.constant 0 : i32
    %c0_i32_1 = arith.constant 0 : i32
    return %c0_i32, %c0_i32_0 : i32, i32
  }
  func.func @transform_4(%arg0: i32) -> (i32, i32) {
    %c0_i32 = arith.constant 0 : i32
    %c0_i32_0 = arith.constant 0 : i32
    %c0_i32_1 = arith.constant 0 : i32
    return %c0_i32, %c0_i32_0 : i32, i32
  }
  func.func @transform_5(%arg0: i32) -> (i32, i32) {
    %c0_i32 = arith.constant 0 : i32
    %c0_i32_0 = arith.constant 0 : i32
    return %arg0, %c0_i32 : i32, i32
  }
}

</mosaic_0001>

<llo_original>
// kernel: tpu_custom_call.1
$region0: #{tpu_custom_call.1}
  #allocation0 [shape = 'u32[]', space=smem, size = 0x4, offset = 0x4, fixed_abs, tag = 'smem constant byte address 0x4 - core index']
  #allocation1 [shape = 'u32[144,128]{1,0:T(1,128)}', space=vmem, size = 0x12000, scoped, tag = 'internal scratch']
  %s0 = inlined_call_operand.hbm [shape: f32[32,64], index: 0, kind: input, shape index: {}]
  %s1 = inlined_call_operand.hbm [shape: bf16[64,512], index: 1, kind: input, shape index: {}]
  %s2 = inlined_call_operand.vmem [shape: f32[1,128], index: 2, kind: input, shape index: {}]
  %s3 = inlined_call_operand.hbm [shape: bf16[128,384], index: 3, kind: input, shape index: {}]
  %s4 = inlined_call_operand.vmem [shape: f32[1,128], index: 4, kind: input, shape index: {}]
  %s5 = inlined_call_operand.hbm [shape: f32[32,128], index: 5, kind: output, shape index: {}]
  %s6 = sld [smem:[#allocation0]]
  $region65: #{tpu_custom_call.1} parent=0
    _
  %s8 = ssub.s32 1, %s6
  %s9 = scalar_select 0, %s8, %s6
  $region1: #{tpu_custom_call.1} parent=0
    #allocation2 [shape = 'u8[16384]{0}', space=vmem, size = 0x4000, scoped, tag = 'input window, operand 0']
    #allocation3 [shape = 's32[2]{0}', space=sflag, size = 0x8, scoped, tag = 'scoped memory for tpu_custom_call.1']
    #allocation4 [shape = 's32[2]{0}', space=sflag, size = 0x8, scoped, tag = 'scoped memory for tpu_custom_call.1']
    #allocation5 [shape = 'u8[65536]{0}', space=vmem, size = 0x10000, scoped, tag = 'input window, operand 1, single buffered']
    #allocation6 [shape = 's32[1]{0}', space=sflag, size = 0x4, scoped, tag = 'scoped memory for tpu_custom_call.1']
    #allocation7 [shape = 'u8[98304]{0}', space=vmem, size = 0x18000, scoped, tag = 'input window, operand 3, single buffered']
    #allocation8 [shape = 'u8[16384]{0}', space=vmem, size = 0x4000, scoped, tag = 'output window, operand 0']
    %10 = vsyncpa [#allocation3], 0
    %s11 = scalar_lea.sflag [#allocation3], 1
    %12 = vsyncpa %s11, 0
    %13 = vsyncpa [#allocation6], 0
    %14 = vsyncpa [#allocation4], 0
    %s15 = scalar_lea.sflag [#allocation4], 1
    %16 = vsyncpa %s15, 0
    loop: start=0, step=1, limit=4
    $region2: #{tpu_custom_call.1} parent=1 // loop_pre_header
      _
    $region3: #{tpu_custom_call.1} parent=1 // loop_header
      %s18 = sphi 0, %s22
      %p19 = scmp.ge.s32.totalorder %s18, 4
      %s28 = sphi 0, %s30
      %s31 = sphi 0, %s28
      %s32 = sphi 0, %s31
      %s48 = sphi 0, %s32
      %s52 = sphi 0, %s52
      %s54 = sphi 0, %s52
      %s55 = sphi 0, %s54
      %s69 = sphi 0, %s55
      %s73 = sphi 0, %s73
      %s75 = sphi 0, %s73
      %s76 = sphi 0, %s75
      %s90 = sphi 0, %s76
      %s94 = sphi 0, %s94
      %s96 = sphi 0, %s94
      %s97 = sphi 0, %s96
      %s111 = sphi 0, %s97
      %s115 = sphi 0, %s115
      %s117 = sphi 0, %s115
      %s118 = sphi 0, %s117
      %s132 = sphi 0, %s118
      %s138 = sphi 0, %s140
      %s141 = sphi 0, %s138
      %s142 = sphi 0, %s141
      %s158 = sphi 0, %s142
    $region4: #{tpu_custom_call.1} parent=1 // loop_header_branch
      %21 = sbr.rel (%p19) target = $region8
    $region5: #{tpu_custom_call.1} parent=1 // loop_body
      %s23 = ssub.s32 %s18, 1
      %s24 = ssub.s32 %s18, 2
      %s25 = sadd.s32 %s18, 1
      %s26 = ssub.s32 %s18, %s25
      %p27 = scmp.eq.s32.totalorder %s26, 0
      %s29 = sadd.s32 %s28, 1
      %s30 = scalar_select %p27, %s28, %s29
      %p33 = pneg %p27
      %p34 = scmp.eq.s32.totalorder %s18, 1
      %p35 = por %p33, %p34
      %p36 = scmp.ne.s32.totalorder %s28, %s31
      %p37 = scmp.eq.s32.totalorder %s18, 0
      %p38 = por %p36, %p37
      %p39 = scmp.ne.s32.totalorder %s28, %s31
      %p40 = scmp.eq.s32.totalorder %s23, 1
      %p41 = por %p39, %p40
      %p42 = scmp.ne.s32.totalorder %s31, %s32
      %p43 = scmp.eq.s32.totalorder %s23, 0
      %p44 = por %p42, %p43
      %p45 = scmp.ne.s32.totalorder %s31, %s32
      %p46 = scmp.eq.s32.totalorder %s24, 1
      %p47 = por %p45, %p46
      %p49 = scmp.ne.s32.totalorder %s32, %s48
      %p50 = scmp.eq.s32.totalorder %s24, 0
      %p51 = por %p49, %p50
      %s53 = sadd.s32 %s52, 1
      %p56 = scmp.eq.s32.totalorder %s18, 1
      %p57 = scmp.ne.s32.totalorder %s52, %s54
      %p58 = scmp.eq.s32.totalorder %s18, 0
      %p59 = por %p57, %p58
      %p60 = scmp.ne.s32.totalorder %s52, %s54
      %p61 = scmp.eq.s32.totalorder %s23, 1
      %p62 = por %p60, %p61
      %p63 = scmp.ne.s32.totalorder %s54, %s55
      %p64 = scmp.eq.s32.totalorder %s23, 0
      %p65 = por %p63, %p64
      %p66 = scmp.ne.s32.totalorder %s54, %s55
      %p67 = scmp.eq.s32.totalorder %s24, 1
      %p68 = por %p66, %p67
      %p70 = scmp.ne.s32.totalorder %s55, %s69
      %p71 = scmp.eq.s32.totalorder %s24, 0
      %p72 = por %p70, %p71
      %s74 = sadd.s32 %s73, 1
      %p77 = scmp.eq.s32.totalorder %s18, 1
      %p78 = scmp.ne.s32.totalorder %s73, %s75
      %p79 = scmp.eq.s32.totalorder %s18, 0
      %p80 = por %p78, %p79
      %p81 = scmp.ne.s32.totalorder %s73, %s75
      %p82 = scmp.eq.s32.totalorder %s23, 1
      %p83 = por %p81, %p82
      %p84 = scmp.ne.s32.totalorder %s75, %s76
      %p85 = scmp.eq.s32.totalorder %s23, 0
      %p86 = por %p84, %p85
      %p87 = scmp.ne.s32.totalorder %s75, %s76
      %p88 = scmp.eq.s32.totalorder %s24, 1
      %p89 = por %p87, %p88
      %p91 = scmp.ne.s32.totalorder %s76, %s90
      %p92 = scmp.eq.s32.totalorder %s24, 0
      %p93 = por %p91, %p92
      %s95 = sadd.s32 %s94, 1
      %p98 = scmp.eq.s32.totalorder %s18, 1
      %p99 = scmp.ne.s32.totalorder %s94, %s96
      %p100 = scmp.eq.s32.totalorder %s18, 0
      %p101 = por %p99, %p100
      %p102 = scmp.ne.s32.totalorder %s94, %s96
      %p103 = scmp.eq.s32.totalorder %s23, 1
      %p104 = por %p102, %p103
      %p105 = scmp.ne.s32.totalorder %s96, %s97
      %p106 = scmp.eq.s32.totalorder %s23, 0
      %p107 = por %p105, %p106
      %p108 = scmp.ne.s32.totalorder %s96, %s97
      %p109 = scmp.eq.s32.totalorder %s24, 1
      %p110 = por %p108, %p109
      %p112 = scmp.ne.s32.totalorder %s97, %s111
      %p113 = scmp.eq.s32.totalorder %s24, 0
      %p114 = por %p112, %p113
      %s116 = sadd.s32 %s115, 1
      %p119 = scmp.eq.s32.totalorder %s18, 1
      %p120 = scmp.ne.s32.totalorder %s115, %s117
      %p121 = scmp.eq.s32.totalorder %s18, 0
      %p122 = por %p120, %p121
      %p123 = scmp.ne.s32.totalorder %s115, %s117
      %p124 = scmp.eq.s32.totalorder %s23, 1
      %p125 = por %p123, %p124
      %p126 = scmp.ne.s32.totalorder %s117, %s118
      %p127 = scmp.eq.s32.totalorder %s23, 0
      %p128 = por %p126, %p127
      %p129 = scmp.ne.s32.totalorder %s117, %s118
      %p130 = scmp.eq.s32.totalorder %s24, 1
      %p131 = por %p129, %p130
      %p133 = scmp.ne.s32.totalorder %s118, %s132
      %p134 = scmp.eq.s32.totalorder %s24, 0
      %p135 = por %p133, %p134
      %s136 = ssub.s32 %s18, %s25
      %p137 = scmp.eq.s32.totalorder %s136, 0
      %s139 = sadd.s32 %s138, 1
      %s140 = scalar_select %p137, %s138, %s139
      %p143 = pneg %p137
      %p144 = scmp.eq.s32.totalorder %s18, 1
      %p145 = por %p143, %p144
      %p146 = scmp.ne.s32.totalorder %s138, %s141
      %p147 = scmp.eq.s32.totalorder %s18, 0
      %p148 = por %p146, %p147
      %p149 = scmp.ne.s32.totalorder %s138, %s141
      %p150 = scmp.eq.s32.totalorder %s23, 1
      %p151 = por %p149, %p150
      %p152 = scmp.ne.s32.totalorder %s141, %s142
      %p153 = scmp.eq.s32.totalorder %s23, 0
      %p154 = por %p152, %p153
      %p155 = scmp.ne.s32.totalorder %s141, %s142
      %p156 = scmp.eq.s32.totalorder %s24, 1
      %p157 = por %p155, %p156
      %p159 = scmp.ne.s32.totalorder %s142, %s158
      %p160 = scmp.eq.s32.totalorder %s24, 0
      %p161 = por %p159, %p160
      %p162 = scmp.le.s32.totalorder 1, %s18
      %p163 = scmp.lt.s32.totalorder %s18, 3
      %p164 = pnand %p162, %p163
      %p165 = pneg %p164
      // Predicated region
      $region9: #{tpu_custom_call.1} parent=5 // pred_check
        _
      $region10: #{tpu_custom_call.1} parent=5 // pred_check_branch
        %167 = sbr.rel (%p164) target = $region12
      $region11: #{tpu_custom_call.1} parent=5 // pred_region
        %s168 = ssub.s32 %s18, 1
        // Predicated region
        $region13: #{tpu_custom_call.1} parent=11 // pred_check
          %p169 = pneg %p65
        $region14: #{tpu_custom_call.1} parent=11 // pred_check_branch
          %171 = sbr.rel (%p169) target = $region16
        $region15: #{tpu_custom_call.1} parent=11 // pred_region
          %s173 = ssub.s32 2048, 2048
          %174 = vsyncadd [#allocation6], %s173
          %s175 = sshll.u32 [#allocation5], 4
          %s176 = int_to_ptr.vmem [resolvable:$true] %s175
          %181 = dma.hbm_to_vmem [thread:$0]  %s1, 2048, %s176, [#allocation6], 256, 256, 16
        $region16: #{tpu_custom_call.1} parent=11 // pred_fallthru
          _
        // Predicated region
        $region17: #{tpu_custom_call.1} parent=11 // pred_check
          %p182 = pneg %p86
        $region18: #{tpu_custom_call.1} parent=11 // pred_check_branch
          %184 = sbr.rel (%p182) target = $region20
        $region19: #{tpu_custom_call.1} parent=11 // pred_region
          _
        $region20: #{tpu_custom_call.1} parent=11 // pred_fallthru
          _
        // Predicated region
        $region21: #{tpu_custom_call.1} parent=11 // pred_check
          %p185 = pneg %p107
        $region22: #{tpu_custom_call.1} parent=11 // pred_check_branch
          %187 = sbr.rel (%p185) target = $region24
        $region23: #{tpu_custom_call.1} parent=11 // pred_region
          %s189 = ssub.s32 3072, 3072
          %190 = vsyncadd [#allocation6], %s189
          %s191 = sshll.u32 [#allocation7], 4
          %s192 = int_to_ptr.vmem [resolvable:$true] %s191
          %197 = dma.hbm_to_vmem [thread:$0]  %s3, 3072, %s192, [#allocation6], 192, 192, 12
        $region24: #{tpu_custom_call.1} parent=11 // pred_fallthru
          _
        // Predicated region
        $region25: #{tpu_custom_call.1} parent=11 // pred_check
          %p198 = pneg %p128
        $region26: #{tpu_custom_call.1} parent=11 // pred_check_branch
          %200 = sbr.rel (%p198) target = $region28
        $region27: #{tpu_custom_call.1} parent=11 // pred_region
          _
        $region28: #{tpu_custom_call.1} parent=11 // pred_fallthru
          _
      $region12: #{tpu_custom_call.1} parent=5 // pred_fallthru
        _
      %p201 = scmp.lt.s32.totalorder %s18, 2
      // Predicated region
      $region29: #{tpu_custom_call.1} parent=5 // pred_check
        %p202 = pneg %p201
      $region30: #{tpu_custom_call.1} parent=5 // pred_check_branch
        %204 = sbr.rel (%p202) target = $region32
      $region31: #{tpu_custom_call.1} parent=5 // pred_region
        // Predicated region
        $region33: #{tpu_custom_call.1} parent=31 // pred_check
          %p205 = pneg %p38
        $region34: #{tpu_custom_call.1} parent=31 // pred_check_branch
          %207 = sbr.rel (%p205) target = $region36
        $region35: #{tpu_custom_call.1} parent=31 // pred_region
          %s208 = sand.u32 %s28, 1
          %s209 = scalar_lea.sflag [#allocation3], %s208
          %s210 = sand.u32 %s28, 1
          %s211 = smul.addr %s210, 16
          %s212 = scalar_lea.vmem [#allocation2], %s211
          %s213 = smul.u32 2, %s18
          %s215 = ssub.s32 256, 256
          %216 = vsyncadd %s209, %s215
          %s217 = smul.addr %s213, 128
          %s218 = scalar_lea.hbm %s0, %s217
          %s219 = sshll.u32 %s212, 4
          %s220 = int_to_ptr.vmem [resolvable:$true] %s219
          %225 = dma.hbm_to_vmem [thread:$0]  %s218, 256, %s220, %s209, 128, 128, 8
        $region36: #{tpu_custom_call.1} parent=31 // pred_fallthru
          _
      $region32: #{tpu_custom_call.1} parent=5 // pred_fallthru
        _
      %p226 = scmp.le.s32.totalorder 1, %s18
      %p227 = scmp.lt.s32.totalorder %s18, 3
      %p228 = pnand %p226, %p227
      %p229 = pneg %p228
      // Predicated region
      $region37: #{tpu_custom_call.1} parent=5 // pred_check
        _
      $region38: #{tpu_custom_call.1} parent=5 // pred_check_branch
        %231 = sbr.rel (%p228) target = $region40
      $region39: #{tpu_custom_call.1} parent=5 // pred_region
        %s232 = ssub.s32 %s18, 1
        %s233 = sand.u32 %s31, 1
        %s234 = scalar_lea.sflag [#allocation3], %s233
        %s235 = sand.u32 %s31, 1
        %s236 = smul.addr %s235, 16
        %s237 = scalar_lea.vmem [#allocation2], %s236
        // Predicated region
        $region41: #{tpu_custom_call.1} parent=39 // pred_check
          %p238 = pneg %p44
        $region42: #{tpu_custom_call.1} parent=39 // pred_check_branch
          %240 = sbr.rel (%p238) target = $region44
        $region43: #{tpu_custom_call.1} parent=39 // pred_region
          %241 = dma.done %s234, 256
        $region44: #{tpu_custom_call.1} parent=39 // pred_fallthru
          _
        // Predicated region
        $region45: #{tpu_custom_call.1} parent=39 // pred_check
          %p242 = pneg %p65
        $region46: #{tpu_custom_call.1} parent=39 // pred_check_branch
          %244 = sbr.rel (%p242) target = $region48
        $region47: #{tpu_custom_call.1} parent=39 // pred_region
          %245 = dma.done [#allocation6], 2048
        $region48: #{tpu_custom_call.1} parent=39 // pred_fallthru
          _
        // Predicated region
        $region49: #{tpu_custom_call.1} parent=39 // pred_check
          %p246 = pneg %p107
        $region50: #{tpu_custom_call.1} parent=39 // pred_check_branch
          %248 = sbr.rel (%p246) target = $region52
        $region51: #{tpu_custom_call.1} parent=39 // pred_region
          %249 = dma.done [#allocation6], 3072
        $region52: #{tpu_custom_call.1} parent=39 // pred_fallthru
          _
        %s250 = sand.u32 %s31, 1
        %s251 = scalar_lea.sflag [#allocation3], %s250
        %s252 = sand.u32 %s31, 1
        %s253 = smul.addr %s252, 16
        %s254 = scalar_lea.vmem [#allocation2], %s253
        %p255 = pneg %p44
        %p256 = pneg %p41
        %p257 = pneg %p65
        %p258 = pneg %p62
        %p259 = pneg %p86
        %p260 = pneg %p83
        %p261 = pneg %p107
        %p262 = pneg %p104
        %p263 = pneg %p128
        %p264 = pneg %p125
        %p265 = pneg %p154
        %p266 = pneg %p151
        %s267 = sand.u32 %s141, 1
        %s268 = scalar_lea.sflag [#allocation4], %s267
        %s269 = sand.u32 %s141, 1
        %s270 = smul.addr %s269, 16
        %s271 = scalar_lea.vmem [#allocation8], %s270
        %s272 = smul.u32 2, %s23
        %s273 = smul.u32 2, %s23
        %v275 = vlaneseq
        %v276 = vshrl.u32 %v275, 7
        %v277 = vadd.s32 %v276, 8
        %vm278 = vcmp.lt.s32.totalorder %v276, 0
        %v279 = vsub.s32 0, %v276
        %v280 = vsel %vm278, %v279, %v276
        %v281 = vshrl.u32 %v280, 4
        %v282 = vand.u32 %v280, 15
        %v283 = vsub.s32 0, %v282
        %v284 = vsel %vm278, %v283, %v282
        %vm285 = vcmp.lt.s32.totalorder %v277, 0
        %v286 = vsub.s32 0, %v277
        %v287 = vsel %vm285, %v286, %v277
        %v288 = vshrl.u32 %v287, 4
        %v289 = vand.u32 %v287, 15
        %v290 = vsub.s32 0, %v289
        %v291 = vsel %vm285, %v290, %v289
        %vm292 = vcmp.ne.s32.totalorder %v284, 0
        %vm293 = vcmp.ne.s32.totalorder %v291, 0
        %vm294 = vcmp.lt.s32.totalorder %v284, 0
        %vm295 = vcmp.lt.s32.totalorder %v291, 0
        %vm296 = vmand %vm294, %vm292
        %vm297 = vmand %vm295, %vm293
        %v298 = vadd.s32 %v284, 16
        %v299 = vadd.s32 %v291, 16
        %v300 = vsel %vm296, %v298, %v284
        %v301 = vsel %vm297, %v299, %v291
        %vm302 = vcmp.eq.s32.totalorder %v300, 0
        %vm303 = vcmp.eq.s32.totalorder %v301, 0
        %vm304 = vcmp.eq.s32.totalorder %v300, 15
        %vm305 = vcmp.eq.s32.totalorder %v301, 15
        %v306 = vld [vmem:[%s237] sm:$0xff]
        %v307 = vld [vmem:[%s237 + $0x8] sm:$0xff]
        %v308 = vpack.c.bf16 %v307, %v306
        %v309 = vld [vmem:[#allocation5] sm:$0xff]
        %v310 = vld [vmem:[#allocation5 + $0x8] sm:$0xff]
        %v311 = vld [vmem:[#allocation5 + $0x10] sm:$0xff]
        %v312 = vld [vmem:[#allocation5 + $0x18] sm:$0xff]
        %v313 = vld [vmem:[#allocation5 + $0x20] sm:$0xff]
        %v314 = vld [vmem:[#allocation5 + $0x28] sm:$0xff]
        %v315 = vld [vmem:[#allocation5 + $0x30] sm:$0xff]
        %v316 = vld [vmem:[#allocation5 + $0x38] sm:$0xff]
        %v317 = vld [vmem:[#allocation5 + $0x40] sm:$0xff]
        %v318 = vld [vmem:[#allocation5 + $0x48] sm:$0xff]
        %v319 = vld [vmem:[#allocation5 + $0x50] sm:$0xff]
        %v320 = vld [vmem:[#allocation5 + $0x58] sm:$0xff]
        %v321 = vld [vmem:[#allocation5 + $0x60] sm:$0xff]
        %v322 = vld [vmem:[#allocation5 + $0x68] sm:$0xff]
        %v323 = vld [vmem:[#allocation5 + $0x70] sm:$0xff]
        %v324 = vld [vmem:[#allocation5 + $0x78] sm:$0xff]
        %v341 = vunpack.c.l.b16 %v309
        %v342 = vunpack.c.h.b16 %v309
        %v343 = vunpack.c.l.b16 %v310
        %v344 = vunpack.c.h.b16 %v310
        %v345 = vunpack.c.l.b16 %v311
        %v346 = vunpack.c.h.b16 %v311
        %v347 = vunpack.c.l.b16 %v312
        %v348 = vunpack.c.h.b16 %v312
        %v349 = vunpack.c.l.b16 %v313
        %v350 = vunpack.c.h.b16 %v313
        %v351 = vunpack.c.l.b16 %v314
        %v352 = vunpack.c.h.b16 %v314
        %v353 = vunpack.c.l.b16 %v315
        %v354 = vunpack.c.h.b16 %v315
        %v355 = vunpack.c.l.b16 %v316
        %v356 = vunpack.c.h.b16 %v316
        %v357 = vunpack.c.l.b16 %v317
        %v358 = vunpack.c.h.b16 %v317
        %v359 = vunpack.c.l.b16 %v318
        %v360 = vunpack.c.h.b16 %v318
        %v361 = vunpack.c.l.b16 %v319
        %v362 = vunpack.c.h.b16 %v319
        %v363 = vunpack.c.l.b16 %v320
        %v364 = vunpack.c.h.b16 %v320
        %v365 = vunpack.c.l.b16 %v321
        %v366 = vunpack.c.h.b16 %v321
        %v367 = vunpack.c.l.b16 %v322
        %v368 = vunpack.c.h.b16 %v322
        %v369 = vunpack.c.l.b16 %v323
        %v370 = vunpack.c.h.b16 %v323
        %v371 = vunpack.c.l.b16 %v324
        %v372 = vunpack.c.h.b16 %v324
        %v373 = vpack.c.b16 %v345, %v341
        %v374 = vpack.c.b16 %v346, %v342
        %v375 = vpack.c.b16 %v347, %v343
        %v376 = vpack.c.b16 %v348, %v344
        %v377 = vpack.c.b16 %v353, %v349
        %v378 = vpack.c.b16 %v354, %v350
        %v379 = vpack.c.b16 %v355, %v351
        %v380 = vpack.c.b16 %v356, %v352
        %v381 = vpack.c.b16 %v361, %v357
        %v382 = vpack.c.b16 %v362, %v358
        %v383 = vpack.c.b16 %v363, %v359
        %v384 = vpack.c.b16 %v364, %v360
        %v385 = vpack.c.b16 %v369, %v365
        %v386 = vpack.c.b16 %v370, %v366
        %v387 = vpack.c.b16 %v371, %v367
        %v388 = vpack.c.b16 %v372, %v368
        %vm405 = vcmask 523264
        %v407 = vsel %vm405, %v308, 0
        %409 = vmatprep.subr.bf16.mxu0 %v374
        %410 = vmatpush1.bf16.msra.mxu0 %v373
        %411 = vmatprep.subr.bf16.mxu0 %v378
        %412 = vmatpush1.bf16.msra.mxu0 %v377
        %413 = vmatprep.subr.bf16.mxu0 %v382
        %414 = vmatpush1.bf16.msra.mxu0 %v381
        %415 = vmatprep.subr.bf16.mxu0 %v386
        %416 = vmatpush1.bf16.msra.mxu0 %v385
        %417 = vmatprep.subr.bf16.mxu0 0
        %418 = vmatpush1.bf16.msra.mxu0 0
        %419 = vmatprep.subr.bf16.mxu0 0
        %420 = vmatpush1.bf16.msra.mxu0 0
        %421 = vmatprep.subr.bf16.mxu0 0
        %422 = vmatpush1.bf16.msra.mxu0 0
        %423 = vmatprep.subr.bf16.mxu0 0
        %424 = vmatpush1.bf16.msra.mxu0 0
        %425 = vmatprep.subr.bf16.mxu0 0
        %426 = vmatpush1.bf16.msra.mxu0 0
        %427 = vmatprep.subr.bf16.mxu0 0
        %428 = vmatpush1.bf16.msra.mxu0 0
        %429 = vmatprep.subr.bf16.mxu0 0
        %430 = vmatpush1.bf16.msra.mxu0 0
        %431 = vmatprep.subr.bf16.mxu0 0
        %432 = vmatpush1.bf16.msra.mxu0 0
        %433 = vmatprep.subr.bf16.mxu0 0
        %434 = vmatpush1.bf16.msra.mxu0 0
        %435 = vmatprep.subr.bf16.mxu0 0
        %436 = vmatpush1.bf16.msra.mxu0 0
        %437 = vmatprep.subr.bf16.mxu0 0
        %438 = vmatpush1.bf16.msra.mxu0 0
        %439 = vmatprep.subr.bf16.mxu0 0
        %440 = vmatpush1.bf16.msra.mxu0 0
        %441 = vmatprep.mubr.bf16.mxu0 0
        %442 = vmatmul.mubr.bf16.gmra.mrb[0].mxu0 %v407
        %v443 = vpop.f32.mrb[0].mxu0
        %v444 = vadd.f32 0.0, %v443
        %v445 = vpop.f32.mrb[0].mxu0
        %v446 = vadd.f32 0.0, %v445
        %v447 = vpop.f32.mrb[0].mxu0
        %v448 = vadd.f32 0.0, %v447
        %v449 = vpop.f32.mrb[0].mxu0
        %v450 = vadd.f32 0.0, %v449
        %451 = vdwg.mxu0
        %452 = vmatprep.subr.bf16.mxu0 %v376
        %453 = vmatpush1.bf16.msra.mxu0 %v375
        %454 = vmatprep.subr.bf16.mxu0 %v380
        %455 = vmatpush1.bf16.msra.mxu0 %v379
        %456 = vmatprep.subr.bf16.mxu0 %v384
        %457 = vmatpush1.bf16.msra.mxu0 %v383
        %458 = vmatprep.subr.bf16.mxu0 %v388
        %459 = vmatpush1.bf16.msra.mxu0 %v387
        %460 = vmatprep.subr.bf16.mxu0 0
        %461 = vmatpush1.bf16.msra.mxu0 0
        %462 = vmatprep.subr.bf16.mxu0 0
        %463 = vmatpush1.bf16.msra.mxu0 0
        %464 = vmatprep.subr.bf16.mxu0 0
        %465 = vmatpush1.bf16.msra.mxu0 0
        %466 = vmatprep.subr.bf16.mxu0 0
        %467 = vmatpush1.bf16.msra.mxu0 0
        %468 = vmatprep.subr.bf16.mxu0 0
        %469 = vmatpush1.bf16.msra.mxu0 0
        %470 = vmatprep.subr.bf16.mxu0 0
        %471 = vmatpush1.bf16.msra.mxu0 0
        %472 = vmatprep.subr.bf16.mxu0 0
        %473 = vmatpush1.bf16.msra.mxu0 0
        %474 = vmatprep.subr.bf16.mxu0 0
        %475 = vmatpush1.bf16.msra.mxu0 0
        %476 = vmatprep.subr.bf16.mxu0 0
        %477 = vmatpush1.bf16.msra.mxu0 0
        %478 = vmatprep.subr.bf16.mxu0 0
        %479 = vmatpush1.bf16.msra.mxu0 0
        %480 = vmatprep.subr.bf16.mxu0 0
        %481 = vmatpush1.bf16.msra.mxu0 0
        %482 = vmatprep.subr.bf16.mxu0 0
        %483 = vmatpush1.bf16.msra.mxu0 0
        %484 = vmatprep.mubr.bf16.mxu0 0
        %485 = vmatmul.mubr.bf16.gmra.mrb[0].mxu0 %v407
        %v486 = vpop.f32.mrb[0].mxu0
        %v487 = vadd.f32 0.0, %v486
        %v488 = vpop.f32.mrb[0].mxu0
        %v489 = vadd.f32 0.0, %v488
        %v490 = vpop.f32.mrb[0].mxu0
        %v491 = vadd.f32 0.0, %v490
        %v492 = vpop.f32.mrb[0].mxu0
        %v493 = vadd.f32 0.0, %v492
        %494 = vdwg.mxu0
        %v495 = vrot.slane %v444, 7
        %v496 = vrot.slane %v448, 7
        %vm497 = vcmp.lt.s32.totalorder %v276, 1
        %v498 = vsel %vm497, %v495, %v496
        %v499 = vsel %vm497, %v496, %v495
        %v500 = vsel %vm302, 1, 0
        %v501 = vsel %vm303, 1, 0
        %vm502 = vcmp.eq.s32.totalorder %v500, 1
        %vm503 = vcmp.eq.s32.totalorder %v501, 1
        %v504 = vsel %vm502, 0.0, %v499
        %v505 = vsel %vm503, 0.0, %v498
        %v506 = vadd.f32 %v504, %v446
        %v507 = vadd.f32 %v505, %v450
        %v508 = vrot.slane %v487, 1
        %v509 = vrot.slane %v491, 1
        %vm510 = vcmp.lt.s32.totalorder %v276, 7
        %v511 = vsel %vm510, %v508, %v509
        %v512 = vsel %vm510, %v509, %v508
        %v513 = vsel %vm304, 1, 0
        %v514 = vsel %vm305, 1, 0
        %vm515 = vcmp.eq.s32.totalorder %v513, 1
        %vm516 = vcmp.eq.s32.totalorder %v514, 1
        %v517 = vsel %vm515, 0.0, %v511
        %v518 = vsel %vm516, 0.0, %v512
        %v519 = vadd.f32 %v506, %v517
        %v520 = vadd.f32 %v507, %v518
        %v521 = vld [vmem:[%s2] sm:$0x1]
        %v523 = vlaneseq
        %v524 = vshrl.u32 %v523, 7
        %v525 = vsub.s32 0, %v524
        %v526 = vrot.slane %v521, %v525
        %v528 = vadd.f32 %v519, %v526
        %v529 = vadd.f32 %v520, %v526
        %v530 = vmax.f32 %v528, 0.0
        %v531 = vmax.f32 %v529, 0.0
        %v532 = vpack.c.bf16 %v531, %v530
        %v533 = vld [vmem:[#allocation7] sm:$0xff]
        %v534 = vld [vmem:[#allocation7 + $0x8] sm:$0xf]
        %v535 = vld [vmem:[#allocation7 + $0xc] sm:$0xff]
        %v536 = vld [vmem:[#allocation7 + $0x14] sm:$0xf]
        %v537 = vld [vmem:[#allocation7 + $0x18] sm:$0xff]
        %v538 = vld [vmem:[#allocation7 + $0x20] sm:$0xf]
        %v539 = vld [vmem:[#allocation7 + $0x24] sm:$0xff]
        %v540 = vld [vmem:[#allocation7 + $0x2c] sm:$0xf]
        %v541 = vld [vmem:[#allocation7 + $0x30] sm:$0xff]
        %v542 = vld [vmem:[#allocation7 + $0x38] sm:$0xf]
        %v543 = vld [vmem:[#allocation7 + $0x3c] sm:$0xff]
        %v544 = vld [vmem:[#allocation7 + $0x44] sm:$0xf]
        %v545 = vld [vmem:[#allocation7 + $0x48] sm:$0xff]
        %v546 = vld [vmem:[#allocation7 + $0x50] sm:$0xf]
        %v547 = vld [vmem:[#allocation7 + $0x54] sm:$0xff]
        %v548 = vld [vmem:[#allocation7 + $0x5c] sm:$0xf]
        %v549 = vld [vmem:[#allocation7 + $0x60] sm:$0xff]
        %v550 = vld [vmem:[#allocation7 + $0x68] sm:$0xf]
        %v551 = vld [vmem:[#allocation7 + $0x6c] sm:$0xff]
        %v552 = vld [vmem:[#allocation7 + $0x74] sm:$0xf]
        %v553 = vld [vmem:[#allocation7 + $0x78] sm:$0xff]
        %v554 = vld [vmem:[#allocation7 + $0x80] sm:$0xf]
        %v555 = vld [vmem:[#allocation7 + $0x84] sm:$0xff]
        %v556 = vld [vmem:[#allocation7 + $0x8c] sm:$0xf]
        %v557 = vld [vmem:[#allocation7 + $0x90] sm:$0xff]
        %v558 = vld [vmem:[#allocation7 + $0x98] sm:$0xf]
        %v559 = vld [vmem:[#allocation7 + $0x9c] sm:$0xff]
        %v560 = vld [vmem:[#allocation7 + $0xa4] sm:$0xf]
        %v561 = vld [vmem:[#allocation7 + $0xa8] sm:$0xff]
        %v562 = vld [vmem:[#allocation7 + $0xb0] sm:$0xf]
        %v563 = vld [vmem:[#allocation7 + $0xb4] sm:$0xff]
        %v564 = vld [vmem:[#allocation7 + $0xbc] sm:$0xf]
        %v597 = vunpack.c.l.b16 %v533
        %v598 = vunpack.c.h.b16 %v533
        %v599 = vunpack.c.l.b16 %v534
        %v600 = vunpack.c.l.b16 %v535
        %v601 = vunpack.c.h.b16 %v535
        %v602 = vunpack.c.l.b16 %v536
        %v603 = vunpack.c.l.b16 %v537
        %v604 = vunpack.c.h.b16 %v537
        %v605 = vunpack.c.l.b16 %v538
        %v606 = vunpack.c.l.b16 %v539
        %v607 = vunpack.c.h.b16 %v539
        %v608 = vunpack.c.l.b16 %v540
        %v609 = vunpack.c.l.b16 %v541
        %v610 = vunpack.c.h.b16 %v541
        %v611 = vunpack.c.l.b16 %v542
        %v612 = vunpack.c.l.b16 %v543
        %v613 = vunpack.c.h.b16 %v543
        %v614 = vunpack.c.l.b16 %v544
        %v615 = vunpack.c.l.b16 %v545
        %v616 = vunpack.c.h.b16 %v545
        %v617 = vunpack.c.l.b16 %v546
        %v618 = vunpack.c.l.b16 %v547
        %v619 = vunpack.c.h.b16 %v547
        %v620 = vunpack.c.l.b16 %v548
        %v621 = vunpack.c.l.b16 %v549
        %v622 = vunpack.c.h.b16 %v549
        %v623 = vunpack.c.l.b16 %v550
        %v624 = vunpack.c.l.b16 %v551
        %v625 = vunpack.c.h.b16 %v551
        %v626 = vunpack.c.l.b16 %v552
        %v627 = vunpack.c.l.b16 %v553
        %v628 = vunpack.c.h.b16 %v553
        %v629 = vunpack.c.l.b16 %v554
        %v630 = vunpack.c.l.b16 %v555
        %v631 = vunpack.c.h.b16 %v555
        %v632 = vunpack.c.l.b16 %v556
        %v633 = vunpack.c.l.b16 %v557
        %v634 = vunpack.c.h.b16 %v557
        %v635 = vunpack.c.l.b16 %v558
        %v636 = vunpack.c.l.b16 %v559
        %v637 = vunpack.c.h.b16 %v559
        %v638 = vunpack.c.l.b16 %v560
        %v639 = vunpack.c.l.b16 %v561
        %v640 = vunpack.c.h.b16 %v561
        %v641 = vunpack.c.l.b16 %v562
        %v642 = vunpack.c.l.b16 %v563
        %v643 = vunpack.c.h.b16 %v563
        %v644 = vunpack.c.l.b16 %v564
        %v645 = vpack.c.b16 %v600, %v597
        %v646 = vpack.c.b16 %v601, %v598
        %v647 = vpack.c.b16 %v602, %v599
        %v648 = vpack.c.b16 %v606, %v603
        %v649 = vpack.c.b16 %v607, %v604
        %v650 = vpack.c.b16 %v608, %v605
        %v651 = vpack.c.b16 %v612, %v609
        %v652 = vpack.c.b16 %v613, %v610
        %v653 = vpack.c.b16 %v614, %v611
        %v654 = vpack.c.b16 %v618, %v615
        %v655 = vpack.c.b16 %v619, %v616
        %v656 = vpack.c.b16 %v620, %v617
        %v657 = vpack.c.b16 %v624, %v621
        %v658 = vpack.c.b16 %v625, %v622
        %v659 = vpack.c.b16 %v626, %v623
        %v660 = vpack.c.b16 %v630, %v627
        %v661 = vpack.c.b16 %v631, %v628
        %v662 = vpack.c.b16 %v632, %v629
        %v663 = vpack.c.b16 %v636, %v633
        %v664 = vpack.c.b16 %v637, %v634
        %v665 = vpack.c.b16 %v638, %v635
        %v666 = vpack.c.b16 %v642, %v639
        %v667 = vpack.c.b16 %v643, %v640
        %v668 = vpack.c.b16 %v644, %v641
        %693 = vmatprep.subr.bf16.mxu0 %v646
        %694 = vmatpush1.bf16.msra.mxu0 %v645
        %695 = vmatprep.subr.bf16.mxu0 %v649
        %696 = vmatpush1.bf16.msra.mxu0 %v648
        %697 = vmatprep.subr.bf16.mxu0 %v652
        %698 = vmatpush1.bf16.msra.mxu0 %v651
        %699 = vmatprep.subr.bf16.mxu0 %v655
        %700 = vmatpush1.bf16.msra.mxu0 %v654
        %701 = vmatprep.subr.bf16.mxu0 %v658
        %702 = vmatpush1.bf16.msra.mxu0 %v657
        %703 = vmatprep.subr.bf16.mxu0 %v661
        %704 = vmatpush1.bf16.msra.mxu0 %v660
        %705 = vmatprep.subr.bf16.mxu0 %v664
        %706 = vmatpush1.bf16.msra.mxu0 %v663
        %707 = vmatprep.subr.bf16.mxu0 %v667
        %708 = vmatpush1.bf16.msra.mxu0 %v666
        %709 = vmatprep.subr.bf16.mxu0 0
        %710 = vmatpush1.bf16.msra.mxu0 0
        %711 = vmatprep.subr.bf16.mxu0 0
        %712 = vmatpush1.bf16.msra.mxu0 0
        %713 = vmatprep.subr.bf16.mxu0 0
        %714 = vmatpush1.bf16.msra.mxu0 0
        %715 = vmatprep.subr.bf16.mxu0 0
        %716 = vmatpush1.bf16.msra.mxu0 0
        %717 = vmatprep.subr.bf16.mxu0 0
        %718 = vmatpush1.bf16.msra.mxu0 0
        %719 = vmatprep.subr.bf16.mxu0 0
        %720 = vmatpush1.bf16.msra.mxu0 0
        %721 = vmatprep.subr.bf16.mxu0 0
        %722 = vmatpush1.bf16.msra.mxu0 0
        %723 = vmatprep.subr.bf16.mxu0 0
        %724 = vmatpush1.bf16.msra.mxu0 0
        %725 = vmatprep.mubr.bf16.mxu0 0
        %726 = vmatmul.mubr.bf16.gmra.mrb[0].mxu0 %v532
        %v727 = vpop.f32.mrb[0].mxu0
        %v728 = vadd.f32 0.0, %v727
        %v729 = vpop.f32.mrb[0].mxu0
        %v730 = vadd.f32 0.0, %v729
        %v731 = vpop.f32.mrb[0].mxu0
        %v732 = vadd.f32 0.0, %v731
        %v733 = vpop.f32.mrb[0].mxu0
        %v734 = vadd.f32 0.0, %v733
        %735 = vdwg.mxu0
        %736 = vmatprep.subr.bf16.mxu0 0
        %737 = vmatpush1.bf16.msra.mxu0 %v647
        %738 = vmatprep.subr.bf16.mxu0 0
        %739 = vmatpush1.bf16.msra.mxu0 %v650
        %740 = vmatprep.subr.bf16.mxu0 0
        %741 = vmatpush1.bf16.msra.mxu0 %v653
        %742 = vmatprep.subr.bf16.mxu0 0
        %743 = vmatpush1.bf16.msra.mxu0 %v656
        %744 = vmatprep.subr.bf16.mxu0 0
        %745 = vmatpush1.bf16.msra.mxu0 %v659
        %746 = vmatprep.subr.bf16.mxu0 0
        %747 = vmatpush1.bf16.msra.mxu0 %v662
        %748 = vmatprep.subr.bf16.mxu0 0
        %749 = vmatpush1.bf16.msra.mxu0 %v665
        %750 = vmatprep.subr.bf16.mxu0 0
        %751 = vmatpush1.bf16.msra.mxu0 %v668
        %752 = vmatprep.subr.bf16.mxu0 0
        %753 = vmatpush1.bf16.msra.mxu0 0
        %754 = vmatprep.subr.bf16.mxu0 0
        %755 = vmatpush1.bf16.msra.mxu0 0
        %756 = vmatprep.subr.bf16.mxu0 0
        %757 = vmatpush1.bf16.msra.mxu0 0
        %758 = vmatprep.subr.bf16.mxu0 0
        %759 = vmatpush1.bf16.msra.mxu0 0
        %760 = vmatprep.subr.bf16.mxu0 0
        %761 = vmatpush1.bf16.msra.mxu0 0
        %762 = vmatprep.subr.bf16.mxu0 0
        %763 = vmatpush1.bf16.msra.mxu0 0
        %764 = vmatprep.subr.bf16.mxu0 0
        %765 = vmatpush1.bf16.msra.mxu0 0
        %766 = vmatprep.subr.bf16.mxu0 0
        %767 = vmatpush1.bf16.msra.mxu0 0
        %768 = vmatprep.mubr.bf16.mxu0 0
        %769 = vmatmul.mubr.bf16.gmra.mrb[0].mxu0 %v532
        %v770 = vpop.f32.mrb[0].mxu0
        %v771 = vadd.f32 0.0, %v770
        %v772 = vpop.f32.mrb[0].mxu0
        %v773 = vpop.f32.mrb[0].mxu0
        %v774 = vadd.f32 0.0, %v773
        %v775 = vpop.f32.mrb[0].mxu0
        %776 = vdwg.mxu0
        %v777 = vrot.slane %v728, 7
        %v778 = vrot.slane %v732, 7
        %v779 = vsel %vm497, %v777, %v778
        %v780 = vsel %vm497, %v778, %v777
        %v781 = vsel %vm502, 0.0, %v780
        %v782 = vsel %vm503, 0.0, %v779
        %v783 = vadd.f32 %v781, %v730
        %v784 = vadd.f32 %v782, %v734
        %v785 = vrot.slane %v771, 1
        %v786 = vrot.slane %v774, 1
        %v787 = vsel %vm510, %v785, %v786
        %v788 = vsel %vm510, %v786, %v785
        %v789 = vsel %vm515, 0.0, %v787
        %v790 = vsel %vm516, 0.0, %v788
        %v791 = vadd.f32 %v783, %v789
        %v792 = vadd.f32 %v784, %v790
        %v793 = vadd.f32 %v791, %v489
        %v794 = vadd.f32 %v792, %v493
        %v795 = vld [vmem:[%s4] sm:$0x1]
        %v797 = vlaneseq
        %v798 = vshrl.u32 %v797, 7
        %v799 = vsub.s32 0, %v798
        %v800 = vrot.slane %v795, %v799
        %v802 = vadd.f32 %v793, %v800
        %v803 = vadd.f32 %v794, %v800
        %804 = vst [vmem:[%s271] sm:$0xff] %v802
        %805 = vst [vmem:[%s271 + $0x8] sm:$0xff] %v803
        %s806 = sand.u32 %s141, 1
        %s807 = scalar_lea.sflag [#allocation4], %s806
        %s808 = sand.u32 %s141, 1
        %s809 = smul.addr %s808, 16
        %s810 = scalar_lea.vmem [#allocation8], %s809
        // Predicated region
        $region53: #{tpu_custom_call.1} parent=39 // pred_check
          %p811 = pneg %p151
        $region54: #{tpu_custom_call.1} parent=39 // pred_check_branch
          %813 = sbr.rel (%p811) target = $region56
        $region55: #{tpu_custom_call.1} parent=39 // pred_region
          %s814 = smul.u32 2, %s23
          %s816 = ssub.s32 256, 256
          %817 = vsyncadd %s807, %s816
          %s818 = smul.addr %s814, 128
          %s819 = scalar_lea.hbm %s5, %s818
          %s820 = sshll.u32 %s810, 4
          %s821 = int_to_ptr.vmem [resolvable:$true] %s820
          %826 = dma.vmem_to_hbm [thread:$0]  %s821, 256, %s819, %s807, 128, 128, 8
        $region56: #{tpu_custom_call.1} parent=39 // pred_fallthru
          _
      $region40: #{tpu_custom_call.1} parent=5 // pred_fallthru
        _
      %p827 = scmp.le.s32.totalorder 2, %s18
      // Predicated region
      $region57: #{tpu_custom_call.1} parent=5 // pred_check
        %p828 = pneg %p827
      $region58: #{tpu_custom_call.1} parent=5 // pred_check_branch
        %830 = sbr.rel (%p828) target = $region60
      $region59: #{tpu_custom_call.1} parent=5 // pred_region
        %s831 = ssub.s32 %s18, 2
        // Predicated region
        $region61: #{tpu_custom_call.1} parent=59 // pred_check
          %p832 = pneg %p157
        $region62: #{tpu_custom_call.1} parent=59 // pred_check_branch
          %834 = sbr.rel (%p832) target = $region64
        $region63: #{tpu_custom_call.1} parent=59 // pred_region
          %s835 = sand.u32 %s142, 1
          %s836 = scalar_lea.sflag [#allocation4], %s835
          %s837 = sand.u32 %s142, 1
          %s838 = smul.addr %s837, 16
          %s839 = scalar_lea.vmem [#allocation8], %s838
          %840 = dma.done %s836, 256
        $region64: #{tpu_custom_call.1} parent=59 // pred_fallthru
          _
      $region60: #{tpu_custom_call.1} parent=5 // pred_fallthru
        _
    $region6: #{tpu_custom_call.1} parent=1 // loop_footer
      %s22 = sadd.s32 1, %s18
    $region7: #{tpu_custom_call.1} parent=1 // loop_footer_branch
      %17 = sbr.rel target = $region3
    $region8: #{tpu_custom_call.1} parent=1 // loop_exit
      _
    %841 = vsyncpa [#allocation3], 1
    %s842 = scalar_lea.sflag [#allocation3], 1
    %843 = vsyncpa %s842, 1
    %844 = vsyncpa [#allocation6], 1
    %845 = vsyncpa [#allocation4], 1
    %s846 = scalar_lea.sflag [#allocation4], 1
    %847 = vsyncpa %s846, 1

</llo_original>
